<compile_context>
chip_gen: v7x
topology: tpu7x:2x2x1
jax: 0.10.0
libtpu: 0.0.40
codegen_flags: <defaults>
</compile_context>

<pallas_src>
import math
import functools

import jax
import jax.numpy as jnp
from jax.experimental import pallas as pl
from jax.experimental.pallas import tpu as pltpu


def _round_up(x, m):
    return ((x + m - 1) // m) * m


def _pick_tile(n, candidates):
    for c in candidates:
        if n % c == 0:
            return c
    return n


# ----------------------------------------------------------------------------
# Kernel A: feature transform.
#   mu'  = ELU(miu @ W_mu)        sg' = ReLU(sigma @ W_sigma)      Att = exp(-g*sg')
#   ms_mu = [ mu'*Att | 0 ]   ms_sg = [ 0 | sg'*Att^2 ]   (bf16, lane-dense width 2*Fout_p)
# ----------------------------------------------------------------------------
def _transform_kernel(gamma, miu_ref, sig_ref, wmu_ref, wsg_ref, msmu_ref, mssg_ref):
    mu_lin = jnp.dot(miu_ref[...], wmu_ref[...], preferred_element_type=jnp.float32)
    sg_lin = jnp.dot(sig_ref[...], wsg_ref[...], preferred_element_type=jnp.float32)

    # ELU (alpha=1); clamp the exp argument so the unselected branch stays finite.
    mu_act = jnp.where(mu_lin > 0.0, mu_lin, jnp.exp(jnp.minimum(mu_lin, 0.0)) - 1.0)
    sg_act = jnp.maximum(sg_lin, 0.0)
    att = jnp.exp(-gamma * sg_act)

    zeros = jnp.zeros_like(mu_act)
    msmu_ref[...] = jnp.concatenate([mu_act * att, zeros], axis=1).astype(msmu_ref.dtype)
    mssg_ref[...] = jnp.concatenate([zeros, sg_act * att * att], axis=1).astype(mssg_ref.dtype)


def ggcl_transform(miu_p, sigma_p, wmu_p, wsg_p, gamma, tm):
    Np, Fin_p = miu_p.shape
    Fout_p = wmu_p.shape[1]
    f2 = 2 * Fout_p
    kernel = functools.partial(_transform_kernel, float(gamma))
    return pl.pallas_call(
        kernel,
        out_shape=(jax.ShapeDtypeStruct((Np, f2), jnp.bfloat16),
                   jax.ShapeDtypeStruct((Np, f2), jnp.bfloat16)),
        grid_spec=pltpu.PrefetchScalarGridSpec(
            num_scalar_prefetch=0,
            grid=(Np // tm,),
            in_specs=[
                pl.BlockSpec((tm, Fin_p), lambda i: (i, 0)),
                pl.BlockSpec((tm, Fin_p), lambda i: (i, 0)),
                pl.BlockSpec((Fin_p, Fout_p), lambda i: (0, 0)),
                pl.BlockSpec((Fin_p, Fout_p), lambda i: (0, 0)),
            ],
            out_specs=[
                pl.BlockSpec((tm, f2), lambda i: (i, 0)),
                pl.BlockSpec((tm, f2), lambda i: (i, 0)),
            ],
        ),
        compiler_params=pltpu.CompilerParams(
            dimension_semantics=("parallel",),
            vmem_limit_bytes=32 * 1024 * 1024,
        ),
    )(miu_p, sigma_p, wmu_p, wsg_p)


# ----------------------------------------------------------------------------
# Kernel B: neighborhood aggregation (HBM-bound), k-innermost reduction grid axis.
#   out = adj1 @ ms_mu + adj2 @ ms_sg  =  [ adj1@M | adj2@S ]   (single lane-dense store)
#   bf16 MXU inputs, f32 accumulation directly into the k-resident output ref.
# ----------------------------------------------------------------------------
def _agg_kernel_fast(adj1_ref, msmu_ref, mssg_ref, out_ref):
    # Fast path: adj_norm2 == adj_norm1**2, computed on the already-loaded tile.
    k = pl.program_id(1)

    @pl.when(k == 0)
    def _():
        out_ref[...] = jnp.zeros_like(out_ref)

    a = adj1_ref[...]
    a1 = a.astype(jnp.bfloat16)
    a2 = (a * a).astype(jnp.bfloat16)     # square in the HBM dtype (exact-ish on f32 path)

    out_ref[...] += (
        jnp.dot(a1, msmu_ref[...], preferred_element_type=jnp.float32)
        + jnp.dot(a2, mssg_ref[...], preferred_element_type=jnp.float32)
    )


def _agg_kernel_generic(adj1_ref, adj2_ref, msmu_ref, mssg_ref, out_ref):
    k = pl.program_id(1)

    @pl.when(k == 0)
    def _():
        out_ref[...] = jnp.zeros_like(out_ref)

    a1 = adj1_ref[...].astype(jnp.bfloat16)
    a2 = adj2_ref[...].astype(jnp.bfloat16)

    out_ref[...] += (
        jnp.dot(a1, msmu_ref[...], preferred_element_type=jnp.float32)
        + jnp.dot(a2, mssg_ref[...], preferred_element_type=jnp.float32)
    )


def ggcl_aggregate(adj1, ms_mu, ms_sg, tm, tk, adj2=None):
    Np = adj1.shape[0]
    f2 = ms_mu.shape[1]
    if adj2 is None:
        kernel = _agg_kernel_fast
        operands = (adj1, ms_mu, ms_sg)
        in_specs = [
            pl.BlockSpec((tm, tk), lambda i, k: (i, k)),
            pl.BlockSpec((tk, f2), lambda i, k: (k, 0)),
            pl.BlockSpec((tk, f2), lambda i, k: (k, 0)),
        ]
    else:
        kernel = _agg_kernel_generic
        operands = (adj1, adj2, ms_mu, ms_sg)
        in_specs = [
            pl.BlockSpec((tm, tk), lambda i, k: (i, k)),
            pl.BlockSpec((tm, tk), lambda i, k: (i, k)),
            pl.BlockSpec((tk, f2), lambda i, k: (k, 0)),
            pl.BlockSpec((tk, f2), lambda i, k: (k, 0)),
        ]
    return pl.pallas_call(
        kernel,
        out_shape=jax.ShapeDtypeStruct((Np, f2), jnp.float32),
        grid_spec=pltpu.PrefetchScalarGridSpec(
            num_scalar_prefetch=0,
            grid=(Np // tm, Np // tk),
            in_specs=in_specs,
            out_specs=pl.BlockSpec((tm, f2), lambda i, k: (i, 0)),
        ),
        compiler_params=pltpu.CompilerParams(
            dimension_semantics=("parallel", "arbitrary"),
            vmem_limit_bytes=48 * 1024 * 1024,
        ),
    )(*operands)


# ----------------------------------------------------------------------------
# Module wrapper (padding, tile selection, path selection)
# ----------------------------------------------------------------------------
def _pad2(a, rows, cols, dtype=jnp.float32):
    a = a.astype(dtype)
    pr, pc = rows - a.shape[0], cols - a.shape[1]
    if pr == 0 and pc == 0:
        return a
    return jnp.pad(a, ((0, pr), (0, pc)))


def ggcl_d_forward(miu, sigma, adj_norm1, adj_norm2, w_mu, w_sigma, gamma=1.0,
                   adj2_is_adj1_squared=False):
    """If adj2_is_adj1_squared=True, adj_norm2 is never read from HBM; kernel B
    computes the second adjacency tile as adj1*adj1 in-kernel (valid for RGCN)."""
    N, Fin = miu.shape
    Fout = w_mu.shape[1]

    # Feature dims padded so the packed output width (2*Fout_p) is a multiple of 128
    # lanes; node dim padded to a multiple of 128 (zero padding is mathematically exact).
    Fin_p = _round_up(Fin, 64)
    Fout_p = _round_up(Fout, 64)
    Np = _round_up(N, 128)
    f2 = 2 * Fout_p

    # --- tile selection -------------------------------------------------------
    tm_a = _pick_tile(Np, (1024, 512, 256, 128))
    if Np // tm_a < 2 and tm_a >= 256:          # keep >=2 'parallel' tiles (v7x: 2 TCs)
        tm_a //= 2

    tm_b = _pick_tile(Np, (512, 256, 128))
    if Np // tm_b < 2 and tm_b >= 256:
        tm_b //= 2
    tk_b = _pick_tile(Np, (4096, 2048, 1024, 512, 256, 128))

    # Adjacency HBM dtype: when N is ragged the pad pass exists anyway, so cast to bf16
    # there (halves kernel B's adjacency reads).  For aligned N a wrapper-side cast would
    # ADD an extra N^2 pass, so keep f32 in HBM and cast per-tile in-kernel.
    adj_dtype = jnp.bfloat16 if Np != N else jnp.float32
    adj_bytes = 2 if adj_dtype == jnp.bfloat16 else 4
    n_adj_streams = 1 if adj2_is_adj1_squared else 2

    # VMEM budget (double-buffered inputs + resident output + in-kernel temporaries).
    def _agg_vmem_bytes(tm, tk):
        adj_io = n_adj_streams * 2 * tm * tk * adj_bytes   # adjacency tile stream(s)
        adj_tmp = 2 * tm * tk * 2                          # bf16 casts / squared tile
        ms_io = 2 * 2 * tk * f2 * 2                        # two bf16 MS halves
        out_res = tm * f2 * 4                              # k-resident f32 output
        return adj_io + adj_tmp + ms_io + out_res

    VMEM_BUDGET = 28 * 1024 * 1024                         # under the 48 MiB scoped limit
    while tk_b > 128 and _agg_vmem_bytes(tm_b, tk_b) > VMEM_BUDGET:
        tk_b //= 2
    while tm_b > 128 and _agg_vmem_bytes(tm_b, tk_b) > VMEM_BUDGET:
        tm_b //= 2

    # --- pad inputs -----------------------------------------------------------
    miu_p = _pad2(miu, Np, Fin_p)
    sigma_p = _pad2(sigma, Np, Fin_p)
    wmu_p = _pad2(w_mu, Fin_p, Fout_p)
    wsg_p = _pad2(w_sigma, Fin_p, Fout_p)
    adj1_p = _pad2(adj_norm1, Np, Np, dtype=adj_dtype)

    # --- run kernels ----------------------------------------------------------
    ms_mu, ms_sg = ggcl_transform(miu_p, sigma_p, wmu_p, wsg_p, gamma, tm_a)

    if adj2_is_adj1_squared:
        out = ggcl_aggregate(adj1_p, ms_mu, ms_sg, tm_b, tk_b)
    else:
        adj2_p = _pad2(adj_norm2, Np, Np, dtype=adj_dtype)
        out = ggcl_aggregate(adj1_p, ms_mu, ms_sg, tm_b, tk_b, adj2=adj2_p)

    mean_out = out[:N, :Fout]
    sigma_out = out[:N, Fout_p:Fout_p + Fout]
    return mean_out, sigma_out


# ----------------------------------------------------------------------------
# Reference + demo
# ----------------------------------------------------------------------------
def xavier_uniform(key, fan_in, fan_out):
    bound = math.sqrt(6.0 / (fan_in + fan_out))
    return jax.random.uniform(
        key, (fan_in, fan_out), minval=-bound, maxval=bound, dtype=jnp.float32
    )


def reference_forward(miu, sigma, adj1, adj2, w_mu, w_sigma, gamma=1.0):
    mu = miu @ w_mu
    mu = jnp.where(mu > 0.0, mu, jnp.exp(jnp.minimum(mu, 0.0)) - 1.0)
    sg = jnp.maximum(sigma @ w_sigma, 0.0)
    att = jnp.exp(-gamma * sg)
    return adj1 @ (mu * att), adj2 @ (sg * att * att)


def _make_inputs(key, n, f_in, f_out):
    k_mu, k_sg, k_wmu, k_wsg, k_adj = jax.random.split(key, 5)
    miu = jax.random.normal(k_mu, (n, f_in), dtype=jnp.float32)
    sigma = jax.nn.softplus(jax.random.normal(k_sg, (n, f_in), dtype=jnp.float32))
    w_mu = xavier_uniform(k_wmu, f_in, f_out)
    w_sigma = xavier_uniform(k_wsg, f_in, f_out)
    a = (jax.random.uniform(k_adj, (n, n)) < 0.05).astype(jnp.float32)
    a = jnp.minimum(a + a.T + jnp.eye(n, dtype=jnp.float32), 1.0)
    d_inv_sqrt = 1.0 / jnp.sqrt(a.sum(axis=1))
    adj1 = a * d_inv_sqrt[:, None] * d_inv_sqrt[None, :]
    adj2 = adj1 * adj1   # elementwise power-2 normalized adjacency, as used in RGCN
    return miu, sigma, adj1, adj2, w_mu, w_sigma


if __name__ == "__main__":
    gamma = 1.0
    key = jax.random.PRNGKey(0)
    key_a, key_b = jax.random.split(key)

    # bf16 MS intermediate + bf16 adjacency MXU path: <~1% relative error vs f32 ref.
    tol = dict(atol=2e-2, rtol=2e-2)

    # Case 1: aligned shapes (N=256, Fin=32, Fout=64); exercise both the fast path
    # (adj2 computed in-kernel from adj1) and the generic two-adjacency path.
    miu, sigma, adj1, adj2, w_mu, w_sigma = _make_inputs(key_a, 256, 32, 64)
    ref_mean, ref_sigma = reference_forward(miu, sigma, adj1, adj2, w_mu, w_sigma, gamma)

    mean_out, sigma_out = ggcl_d_forward(miu, sigma, adj1, adj2, w_mu, w_sigma,
                                         gamma=gamma, adj2_is_adj1_squared=True)
    jax.block_until_ready((mean_out, sigma_out))
    assert mean_out.shape == ref_mean.shape and sigma_out.shape == ref_sigma.shape
    assert jnp.allclose(mean_out, ref_mean, **tol)
    assert jnp.allclose(sigma_out, ref_sigma, **tol)

    mean_out, sigma_out = ggcl_d_forward(miu, sigma, adj1, adj2, w_mu, w_sigma, gamma=gamma)
    jax.block_until_ready((mean_out, sigma_out))
    assert jnp.allclose(mean_out, ref_mean, **tol)
    assert jnp.allclose(sigma_out, ref_sigma, **tol)

    # Case 2: ragged shapes (N=200, Fin=24, Fout=40) exercise the zero-padding path
    # with the bf16 adjacency storage.
    miu, sigma, adj1, adj2, w_mu, w_sigma = _make_inputs(key_b, 200, 24, 40)
    ref_mean, ref_sigma = reference_forward(miu, sigma, adj1, adj2, w_mu, w_sigma, gamma)
    mean_out, sigma_out = ggcl_d_forward(miu, sigma, adj1, adj2, w_mu, w_sigma, gamma=gamma)
    jax.block_until_ready((mean_out, sigma_out))
    assert mean_out.shape == ref_mean.shape and sigma_out.shape == ref_sigma.shape
    assert jnp.allclose(mean_out, ref_mean, **tol)
    assert jnp.allclose(sigma_out, ref_sigma, **tol)

    print("KERNEL_OK")
</pallas_src>

<mosaic_0001>
module attributes {stable_mosaic.version = 11 : i64} {
  func.func @_transform_kernel(%arg0: i32, %arg1: memref<128x64xf32, #tpu.memory_space<vmem>>, %arg2: memref<128x64xf32, #tpu.memory_space<vmem>>, %arg3: memref<64x64xf32, #tpu.memory_space<vmem>>, %arg4: memref<64x64xf32, #tpu.memory_space<vmem>>, %arg5: memref<128x128xbf16, #tpu.memory_space<vmem>>, %arg6: memref<128x128xbf16, #tpu.memory_space<vmem>>) attributes {dimension_semantics = [#tpu.dimension_semantics<parallel>], iteration_bounds = array<i64: 2>, scalar_prefetch = 0 : i64, scratch_operands = 0 : i64, tpu.core_type = #tpu.core_type<tc>, window_params = [{transform_indices = @transform_0, window_bounds = array<i64: 128, 64>}, {transform_indices = @transform_1, window_bounds = array<i64: 128, 64>}, {pipeline_mode = #tpu.pipeline_mode<synchronous>, transform_indices = @transform_2, window_bounds = array<i64: 64, 64>}, {pipeline_mode = #tpu.pipeline_mode<synchronous>, transform_indices = @transform_3, window_bounds = array<i64: 64, 64>}, {transform_indices = @transform_4, window_bounds = array<i64: 128, 128>}, {transform_indices = @transform_5, window_bounds = array<i64: 128, 128>}]} {
    %c0 = arith.constant 0 : index
    %c0_0 = arith.constant 0 : index
    %0 = vector.load %arg1[%c0, %c0_0] : memref<128x64xf32, #tpu.memory_space<vmem>>, vector<128x64xf32>
    %c0_1 = arith.constant 0 : index
    %c0_2 = arith.constant 0 : index
    %1 = vector.load %arg3[%c0_1, %c0_2] : memref<64x64xf32, #tpu.memory_space<vmem>>, vector<64x64xf32>
    %cst = arith.constant dense<0.000000e+00> : vector<128x64xf32>
    %2 = tpu.matmul %0, %1, %cst {dimension_numbers = #tpu.dot_dimension_numbers<[1], [0], [0], [1], [0, 0, 1, 1], [], []>} : vector<128x64xf32>, vector<64x64xf32>, vector<128x64xf32> -> vector<128x64xf32>
    %c0_3 = arith.constant 0 : index
    %c0_4 = arith.constant 0 : index
    %3 = vector.load %arg2[%c0_3, %c0_4] : memref<128x64xf32, #tpu.memory_space<vmem>>, vector<128x64xf32>
    %c0_5 = arith.constant 0 : index
    %c0_6 = arith.constant 0 : index
    %4 = vector.load %arg4[%c0_5, %c0_6] : memref<64x64xf32, #tpu.memory_space<vmem>>, vector<64x64xf32>
    %cst_7 = arith.constant dense<0.000000e+00> : vector<128x64xf32>
    %5 = tpu.matmul %3, %4, %cst_7 {dimension_numbers = #tpu.dot_dimension_numbers<[1], [0], [0], [1], [0, 0, 1, 1], [], []>} : vector<128x64xf32>, vector<64x64xf32>, vector<128x64xf32> -> vector<128x64xf32>
    %cst_8 = arith.constant 0.000000e+00 : f32
    %6 = vector.broadcast %cst_8 : f32 to vector<128x64xf32>
    %7 = arith.cmpf ogt, %2, %6 : vector<128x64xf32>
    %cst_9 = arith.constant 0.000000e+00 : f32
    %8 = vector.broadcast %cst_9 : f32 to vector<128x64xf32>
    %9 = arith.minimumf %2, %8 : vector<128x64xf32>
    %10 = math.exp %9 : vector<128x64xf32>
    %cst_10 = arith.constant 1.000000e+00 : f32
    %11 = vector.broadcast %cst_10 : f32 to vector<128x64xf32>
    %12 = arith.subf %10, %11 : vector<128x64xf32>
    %13 = arith.select %7, %2, %12 : vector<128x64xi1>, vector<128x64xf32>
    %cst_11 = arith.constant 0.000000e+00 : f32
    %14 = vector.broadcast %cst_11 : f32 to vector<128x64xf32>
    %15 = arith.maximumf %5, %14 : vector<128x64xf32>
    %cst_12 = arith.constant -1.000000e+00 : f32
    %16 = vector.broadcast %cst_12 : f32 to vector<128x64xf32>
    %17 = arith.mulf %16, %15 : vector<128x64xf32>
    %18 = math.exp %17 : vector<128x64xf32>
    %cst_13 = arith.constant 0.000000e+00 : f32
    %19 = vector.broadcast %cst_13 : f32 to vector<128x64xf32>
    %20 = arith.mulf %13, %18 : vector<128x64xf32>
    %21 = tpu.concatenate %20, %19 in 1 : vector<128x64xf32>, vector<128x64xf32> -> vector<128x128xf32>
    %22 = arith.truncf %21 : vector<128x128xf32> to vector<128x128xbf16>
    %c0_14 = arith.constant 0 : index
    %c0_15 = arith.constant 0 : index
    %23 = vector.load %arg5[%c0_14, %c0_15] : memref<128x128xbf16, #tpu.memory_space<vmem>>, vector<128x128xbf16>
    tpu.vector_store %arg5[%c0_14, %c0_15], %22 {strides = array<i32>} : memref<128x128xbf16, #tpu.memory_space<vmem>>, vector<128x128xbf16>,
    %24 = arith.mulf %15, %18 : vector<128x64xf32>
    %25 = arith.mulf %24, %18 : vector<128x64xf32>
    %26 = tpu.concatenate %19, %25 in 1 : vector<128x64xf32>, vector<128x64xf32> -> vector<128x128xf32>
    %27 = arith.truncf %26 : vector<128x128xf32> to vector<128x128xbf16>
    %c0_16 = arith.constant 0 : index
    %c0_17 = arith.constant 0 : index
    %28 = vector.load %arg6[%c0_16, %c0_17] : memref<128x128xbf16, #tpu.memory_space<vmem>>, vector<128x128xbf16>
    tpu.vector_store %arg6[%c0_16, %c0_17], %27 {strides = array<i32>} : memref<128x128xbf16, #tpu.memory_space<vmem>>, vector<128x128xbf16>,
    return
  }
  func.func @transform_0(%arg0: i32) -> (i32, i32) {
    %c0_i32 = arith.constant 0 : i32
    %c0_i32_0 = arith.constant 0 : i32
    return %arg0, %c0_i32 : i32, i32
  }
  func.func @transform_1(%arg0: i32) -> (i32, i32) {
    %c0_i32 = arith.constant 0 : i32
    %c0_i32_0 = arith.constant 0 : i32
    return %arg0, %c0_i32 : i32, i32
  }
  func.func @transform_2(%arg0: i32) -> (i32, i32) {
    %c0_i32 = arith.constant 0 : i32
    %c0_i32_0 = arith.constant 0 : i32
    %c0_i32_1 = arith.constant 0 : i32
    return %c0_i32, %c0_i32_0 : i32, i32
  }
  func.func @transform_3(%arg0: i32) -> (i32, i32) {
    %c0_i32 = arith.constant 0 : i32
    %c0_i32_0 = arith.constant 0 : i32
    %c0_i32_1 = arith.constant 0 : i32
    return %c0_i32, %c0_i32_0 : i32, i32
  }
  func.func @transform_4(%arg0: i32) -> (i32, i32) {
    %c0_i32 = arith.constant 0 : i32
    %c0_i32_0 = arith.constant 0 : i32
    return %arg0, %c0_i32 : i32, i32
  }
  func.func @transform_5(%arg0: i32) -> (i32, i32) {
    %c0_i32 = arith.constant 0 : i32
    %c0_i32_0 = arith.constant 0 : i32
    return %arg0, %c0_i32 : i32, i32
  }
}

</mosaic_0001>

<llo_original>
// kernel: tpu_custom_call.1
$region0: #{tpu_custom_call.1}
  #allocation0 [shape = 'u32[]', space=smem, size = 0x4, offset = 0x4, fixed_abs, tag = 'smem constant byte address 0x4 - core index']
  #allocation1 [shape = 'u32[144,128]{1,0:T(1,128)}', space=vmem, size = 0x12000, scoped, tag = 'internal scratch']
  %s0 = inlined_call_operand.vmem [shape: f32[256,64], index: 0, kind: input, shape index: {}]
  %s1 = inlined_call_operand.vmem [shape: f32[256,64], index: 1, kind: input, shape index: {}]
  %s2 = inlined_call_operand.vmem [shape: f32[64,64], index: 2, kind: input, shape index: {}]
  %s3 = inlined_call_operand.vmem [shape: f32[64,64], index: 3, kind: input, shape index: {}]
  %s4 = inlined_call_operand.hbm [shape: bf16[256,128], index: 4, kind: output, shape index: {0}]
  %s5 = inlined_call_operand.hbm [shape: bf16[256,128], index: 5, kind: output, shape index: {1}]
  %6 = xla_tuple %s4, %s5
  %s7 = sld [smem:[#allocation0]]
  $region57: #{tpu_custom_call.1} parent=0
    _
  %s9 = ssub.s32 1, %s7
  %s10 = scalar_select 0, %s9, %s7
  $region1: #{tpu_custom_call.1} parent=0
    #allocation2 [shape = 'u8[65536]{0}', space=vmem, size = 0x10000, scoped, tag = 'output window, operand 0']
    #allocation3 [shape = 's32[2]{0}', space=sflag, size = 0x8, scoped, tag = 'scoped memory for tpu_custom_call.1']
    #allocation4 [shape = 'u8[65536]{0}', space=vmem, size = 0x10000, scoped, tag = 'output window, operand 1']
    #allocation5 [shape = 's32[2]{0}', space=sflag, size = 0x8, scoped, tag = 'scoped memory for tpu_custom_call.1']
    %11 = vsyncpa [#allocation3], 0
    %s12 = scalar_lea.sflag [#allocation3], 1
    %13 = vsyncpa %s12, 0
    %14 = vsyncpa [#allocation5], 0
    %s15 = scalar_lea.sflag [#allocation5], 1
    %16 = vsyncpa %s15, 0
    loop: start=0, step=1, limit=4
    $region2: #{tpu_custom_call.1} parent=1 // loop_pre_header
      _
    $region3: #{tpu_custom_call.1} parent=1 // loop_header
      %s18 = sphi 0, %s22
      %p19 = scmp.ge.s32.totalorder %s18, 4
      %s28 = sphi 0, %s30
      %s31 = sphi 0, %s28
      %s32 = sphi 0, %s31
      %s48 = sphi 0, %s32
      %s54 = sphi 0, %s56
      %s57 = sphi 0, %s54
      %s58 = sphi 0, %s57
      %s74 = sphi 0, %s58
      %s78 = sphi 0, %s78
      %s80 = sphi 0, %s78
      %s81 = sphi 0, %s80
      %s95 = sphi 0, %s81
      %s99 = sphi 0, %s99
      %s101 = sphi 0, %s99
      %s102 = sphi 0, %s101
      %s116 = sphi 0, %s102
      %s122 = sphi 0, %s124
      %s125 = sphi 0, %s122
      %s126 = sphi 0, %s125
      %s142 = sphi 0, %s126
      %s148 = sphi 0, %s150
      %s151 = sphi 0, %s148
      %s152 = sphi 0, %s151
      %s168 = sphi 0, %s152
    $region4: #{tpu_custom_call.1} parent=1 // loop_header_branch
      %21 = sbr.rel (%p19) target = $region8
    $region5: #{tpu_custom_call.1} parent=1 // loop_body
      %s23 = ssub.s32 %s18, 1
      %s24 = ssub.s32 %s18, 2
      %s25 = sadd.s32 %s18, 1
      %s26 = ssub.s32 %s18, %s25
      %p27 = scmp.eq.s32.totalorder %s26, 0
      %s29 = sadd.s32 %s28, 1
      %s30 = scalar_select %p27, %s28, %s29
      %p33 = pneg %p27
      %p34 = scmp.eq.s32.totalorder %s18, 1
      %p35 = por %p33, %p34
      %p36 = scmp.ne.s32.totalorder %s28, %s31
      %p37 = scmp.eq.s32.totalorder %s18, 0
      %p38 = por %p36, %p37
      %p39 = scmp.ne.s32.totalorder %s28, %s31
      %p40 = scmp.eq.s32.totalorder %s23, 1
      %p41 = por %p39, %p40
      %p42 = scmp.ne.s32.totalorder %s31, %s32
      %p43 = scmp.eq.s32.totalorder %s23, 0
      %p44 = por %p42, %p43
      %p45 = scmp.ne.s32.totalorder %s31, %s32
      %p46 = scmp.eq.s32.totalorder %s24, 1
      %p47 = por %p45, %p46
      %p49 = scmp.ne.s32.totalorder %s32, %s48
      %p50 = scmp.eq.s32.totalorder %s24, 0
      %p51 = por %p49, %p50
      %s52 = ssub.s32 %s18, %s25
      %p53 = scmp.eq.s32.totalorder %s52, 0
      %s55 = sadd.s32 %s54, 1
      %s56 = scalar_select %p53, %s54, %s55
      %p59 = pneg %p53
      %p60 = scmp.eq.s32.totalorder %s18, 1
      %p61 = por %p59, %p60
      %p62 = scmp.ne.s32.totalorder %s54, %s57
      %p63 = scmp.eq.s32.totalorder %s18, 0
      %p64 = por %p62, %p63
      %p65 = scmp.ne.s32.totalorder %s54, %s57
      %p66 = scmp.eq.s32.totalorder %s23, 1
      %p67 = por %p65, %p66
      %p68 = scmp.ne.s32.totalorder %s57, %s58
      %p69 = scmp.eq.s32.totalorder %s23, 0
      %p70 = por %p68, %p69
      %p71 = scmp.ne.s32.totalorder %s57, %s58
      %p72 = scmp.eq.s32.totalorder %s24, 1
      %p73 = por %p71, %p72
      %p75 = scmp.ne.s32.totalorder %s58, %s74
      %p76 = scmp.eq.s32.totalorder %s24, 0
      %p77 = por %p75, %p76
      %s79 = sadd.s32 %s78, 1
      %p82 = scmp.eq.s32.totalorder %s18, 1
      %p83 = scmp.ne.s32.totalorder %s78, %s80
      %p84 = scmp.eq.s32.totalorder %s18, 0
      %p85 = por %p83, %p84
      %p86 = scmp.ne.s32.totalorder %s78, %s80
      %p87 = scmp.eq.s32.totalorder %s23, 1
      %p88 = por %p86, %p87
      %p89 = scmp.ne.s32.totalorder %s80, %s81
      %p90 = scmp.eq.s32.totalorder %s23, 0
      %p91 = por %p89, %p90
      %p92 = scmp.ne.s32.totalorder %s80, %s81
      %p93 = scmp.eq.s32.totalorder %s24, 1
      %p94 = por %p92, %p93
      %p96 = scmp.ne.s32.totalorder %s81, %s95
      %p97 = scmp.eq.s32.totalorder %s24, 0
      %p98 = por %p96, %p97
      %s100 = sadd.s32 %s99, 1
      %p103 = scmp.eq.s32.totalorder %s18, 1
      %p104 = scmp.ne.s32.totalorder %s99, %s101
      %p105 = scmp.eq.s32.totalorder %s18, 0
      %p106 = por %p104, %p105
      %p107 = scmp.ne.s32.totalorder %s99, %s101
      %p108 = scmp.eq.s32.totalorder %s23, 1
      %p109 = por %p107, %p108
      %p110 = scmp.ne.s32.totalorder %s101, %s102
      %p111 = scmp.eq.s32.totalorder %s23, 0
      %p112 = por %p110, %p111
      %p113 = scmp.ne.s32.totalorder %s101, %s102
      %p114 = scmp.eq.s32.totalorder %s24, 1
      %p115 = por %p113, %p114
      %p117 = scmp.ne.s32.totalorder %s102, %s116
      %p118 = scmp.eq.s32.totalorder %s24, 0
      %p119 = por %p117, %p118
      %s120 = ssub.s32 %s18, %s25
      %p121 = scmp.eq.s32.totalorder %s120, 0
      %s123 = sadd.s32 %s122, 1
      %s124 = scalar_select %p121, %s122, %s123
      %p127 = pneg %p121
      %p128 = scmp.eq.s32.totalorder %s18, 1
      %p129 = por %p127, %p128
      %p130 = scmp.ne.s32.totalorder %s122, %s125
      %p131 = scmp.eq.s32.totalorder %s18, 0
      %p132 = por %p130, %p131
      %p133 = scmp.ne.s32.totalorder %s122, %s125
      %p134 = scmp.eq.s32.totalorder %s23, 1
      %p135 = por %p133, %p134
      %p136 = scmp.ne.s32.totalorder %s125, %s126
      %p137 = scmp.eq.s32.totalorder %s23, 0
      %p138 = por %p136, %p137
      %p139 = scmp.ne.s32.totalorder %s125, %s126
      %p140 = scmp.eq.s32.totalorder %s24, 1
      %p141 = por %p139, %p140
      %p143 = scmp.ne.s32.totalorder %s126, %s142
      %p144 = scmp.eq.s32.totalorder %s24, 0
      %p145 = por %p143, %p144
      %s146 = ssub.s32 %s18, %s25
      %p147 = scmp.eq.s32.totalorder %s146, 0
      %s149 = sadd.s32 %s148, 1
      %s150 = scalar_select %p147, %s148, %s149
      %p153 = pneg %p147
      %p154 = scmp.eq.s32.totalorder %s18, 1
      %p155 = por %p153, %p154
      %p156 = scmp.ne.s32.totalorder %s148, %s151
      %p157 = scmp.eq.s32.totalorder %s18, 0
      %p158 = por %p156, %p157
      %p159 = scmp.ne.s32.totalorder %s148, %s151
      %p160 = scmp.eq.s32.totalorder %s23, 1
      %p161 = por %p159, %p160
      %p162 = scmp.ne.s32.totalorder %s151, %s152
      %p163 = scmp.eq.s32.totalorder %s23, 0
      %p164 = por %p162, %p163
      %p165 = scmp.ne.s32.totalorder %s151, %s152
      %p166 = scmp.eq.s32.totalorder %s24, 1
      %p167 = por %p165, %p166
      %p169 = scmp.ne.s32.totalorder %s152, %s168
      %p170 = scmp.eq.s32.totalorder %s24, 0
      %p171 = por %p169, %p170
      %p172 = scmp.le.s32.totalorder 1, %s18
      %p173 = scmp.lt.s32.totalorder %s18, 3
      %p174 = pnand %p172, %p173
      %p175 = pneg %p174
      // Predicated region
      $region9: #{tpu_custom_call.1} parent=5 // pred_check
        _
      $region10: #{tpu_custom_call.1} parent=5 // pred_check_branch
        %177 = sbr.rel (%p174) target = $region12
      $region11: #{tpu_custom_call.1} parent=5 // pred_region
        %s178 = ssub.s32 %s18, 1
        // Predicated region
        $region13: #{tpu_custom_call.1} parent=11 // pred_check
          %p179 = pneg %p91
        $region14: #{tpu_custom_call.1} parent=11 // pred_check_branch
          %181 = sbr.rel (%p179) target = $region16
        $region15: #{tpu_custom_call.1} parent=11 // pred_region
          _
        $region16: #{tpu_custom_call.1} parent=11 // pred_fallthru
          _
        // Predicated region
        $region17: #{tpu_custom_call.1} parent=11 // pred_check
          %p182 = pneg %p112
        $region18: #{tpu_custom_call.1} parent=11 // pred_check_branch
          %184 = sbr.rel (%p182) target = $region20
        $region19: #{tpu_custom_call.1} parent=11 // pred_region
          _
        $region20: #{tpu_custom_call.1} parent=11 // pred_fallthru
          _
      $region12: #{tpu_custom_call.1} parent=5 // pred_fallthru
        _
      %p185 = scmp.lt.s32.totalorder %s18, 2
      // Predicated region
      $region21: #{tpu_custom_call.1} parent=5 // pred_check
        %p186 = pneg %p185
      $region22: #{tpu_custom_call.1} parent=5 // pred_check_branch
        %188 = sbr.rel (%p186) target = $region24
      $region23: #{tpu_custom_call.1} parent=5 // pred_region
        // Predicated region
        $region25: #{tpu_custom_call.1} parent=23 // pred_check
          %p189 = pneg %p38
        $region26: #{tpu_custom_call.1} parent=23 // pred_check_branch
          %191 = sbr.rel (%p189) target = $region28
        $region27: #{tpu_custom_call.1} parent=23 // pred_region
          %s192 = smul.u32 16, %s18
          %p193 = scmp.lt.s32.totalorder %s192, 31
          %s194 = scalar_select %p193, %s192, 31
          %s195 = smul.addr %s194, 8
          %s196 = scalar_lea.vmem %s0, %s195
          %s197 = smul.u32 16, %s18
        $region28: #{tpu_custom_call.1} parent=23 // pred_fallthru
          _
        // Predicated region
        $region29: #{tpu_custom_call.1} parent=23 // pred_check
          %p198 = pneg %p64
        $region30: #{tpu_custom_call.1} parent=23 // pred_check_branch
          %200 = sbr.rel (%p198) target = $region32
        $region31: #{tpu_custom_call.1} parent=23 // pred_region
          %s201 = smul.u32 16, %s18
          %p202 = scmp.lt.s32.totalorder %s201, 31
          %s203 = scalar_select %p202, %s201, 31
          %s204 = smul.addr %s203, 8
          %s205 = scalar_lea.vmem %s1, %s204
          %s206 = smul.u32 16, %s18
        $region32: #{tpu_custom_call.1} parent=23 // pred_fallthru
          _
      $region24: #{tpu_custom_call.1} parent=5 // pred_fallthru
        _
      %p207 = scmp.le.s32.totalorder 1, %s18
      %p208 = scmp.lt.s32.totalorder %s18, 3
      %p209 = pnand %p207, %p208
      %p210 = pneg %p209
      // Predicated region
      $region33: #{tpu_custom_call.1} parent=5 // pred_check
        _
      $region34: #{tpu_custom_call.1} parent=5 // pred_check_branch
        %212 = sbr.rel (%p209) target = $region36
      $region35: #{tpu_custom_call.1} parent=5 // pred_region
        %s213 = ssub.s32 %s18, 1
        %s214 = smul.u32 16, %s23
        %p215 = scmp.lt.s32.totalorder %s214, 31
        %s216 = scalar_select %p215, %s214, 31
        %s217 = smul.addr %s216, 8
        %s218 = scalar_lea.vmem %s0, %s217
        %p219 = pneg %p44
        %p220 = pneg %p41
        %s221 = smul.u32 16, %s23
        %p222 = scmp.lt.s32.totalorder %s221, 31
        %s223 = scalar_select %p222, %s221, 31
        %s224 = smul.addr %s223, 8
        %s225 = scalar_lea.vmem %s1, %s224
        %p226 = pneg %p70
        %p227 = pneg %p67
        %p228 = pneg %p91
        %p229 = pneg %p88
        %p230 = pneg %p112
        %p231 = pneg %p109
        %p232 = pneg %p138
        %p233 = pneg %p135
        %s234 = sand.u32 %s125, 1
        %s235 = scalar_lea.sflag [#allocation3], %s234
        %s236 = sand.u32 %s125, 1
        %s237 = smul.addr %s236, 64
        %s238 = scalar_lea.vmem [#allocation2], %s237
        %p239 = pneg %p164
        %p240 = pneg %p161
        %s241 = sand.u32 %s151, 1
        %s242 = scalar_lea.sflag [#allocation5], %s241
        %s243 = sand.u32 %s151, 1
        %s244 = smul.addr %s243, 64
        %s245 = scalar_lea.vmem [#allocation4], %s244
        %s246 = smul.u32 16, %s23
        %p247 = scmp.lt.s32.totalorder %s246, 31
        %s248 = scalar_select %p247, %s246, 31
        %s249 = smul.addr %s248, 8
        %s250 = scalar_lea.vmem %s0, %s249
        %s251 = smul.u32 16, %s23
        %s252 = smul.u32 16, %s23
        %p253 = scmp.lt.s32.totalorder %s252, 31
        %s254 = scalar_select %p253, %s252, 31
        %s255 = smul.addr %s254, 8
        %s256 = scalar_lea.vmem %s1, %s255
        %s257 = smul.u32 16, %s23
        %s258 = smul.u32 16, %s23
        %s259 = smul.u32 16, %s23
        %v260 = vld [vmem:[%s250] sm:$0xff]
        %v261 = vld [vmem:[%s250 + $0x8] sm:$0xff]
        %v262 = vld [vmem:[%s250 + $0x10] sm:$0xff]
        %v263 = vld [vmem:[%s250 + $0x18] sm:$0xff]
        %v264 = vld [vmem:[%s250 + $0x20] sm:$0xff]
        %v265 = vld [vmem:[%s250 + $0x28] sm:$0xff]
        %v266 = vld [vmem:[%s250 + $0x30] sm:$0xff]
        %v267 = vld [vmem:[%s250 + $0x38] sm:$0xff]
        %v268 = vld [vmem:[%s250 + $0x40] sm:$0xff]
        %v269 = vld [vmem:[%s250 + $0x48] sm:$0xff]
        %v270 = vld [vmem:[%s250 + $0x50] sm:$0xff]
        %v271 = vld [vmem:[%s250 + $0x58] sm:$0xff]
        %v272 = vld [vmem:[%s250 + $0x60] sm:$0xff]
        %v273 = vld [vmem:[%s250 + $0x68] sm:$0xff]
        %v274 = vld [vmem:[%s250 + $0x70] sm:$0xff]
        %v275 = vld [vmem:[%s250 + $0x78] sm:$0xff]
        %v276 = vld [vmem:[%s2] sm:$0xff]
        %v277 = vld [vmem:[%s2 + $0x8] sm:$0xff]
        %v278 = vld [vmem:[%s2 + $0x10] sm:$0xff]
        %v279 = vld [vmem:[%s2 + $0x18] sm:$0xff]
        %v280 = vld [vmem:[%s2 + $0x20] sm:$0xff]
        %v281 = vld [vmem:[%s2 + $0x28] sm:$0xff]
        %v282 = vld [vmem:[%s2 + $0x30] sm:$0xff]
        %v283 = vld [vmem:[%s2 + $0x38] sm:$0xff]
        %vm284 = vcmask 523264
        %v286 = vsel %vm284, %v260, 0
        %v289 = vsel %vm284, %v261, 0
        %v292 = vsel %vm284, %v262, 0
        %v295 = vsel %vm284, %v263, 0
        %v298 = vsel %vm284, %v264, 0
        %v301 = vsel %vm284, %v265, 0
        %v304 = vsel %vm284, %v266, 0
        %v307 = vsel %vm284, %v267, 0
        %v310 = vsel %vm284, %v268, 0
        %v313 = vsel %vm284, %v269, 0
        %v316 = vsel %vm284, %v270, 0
        %v319 = vsel %vm284, %v271, 0
        %v322 = vsel %vm284, %v272, 0
        %v325 = vsel %vm284, %v273, 0
        %v328 = vsel %vm284, %v274, 0
        %v331 = vsel %vm284, %v275, 0
        %333 = vmatprep.subr.mxu0 0.0
        %334 = vmatpush1.msra.mxu0 %v276
        %335 = vmatprep.subr.mxu0 0.0
        %336 = vmatpush1.msra.mxu0 %v277
        %337 = vmatprep.subr.mxu0 0.0
        %338 = vmatpush1.msra.mxu0 %v278
        %339 = vmatprep.subr.mxu0 0.0
        %340 = vmatpush1.msra.mxu0 %v279
        %341 = vmatprep.subr.mxu0 0.0
        %342 = vmatpush1.msra.mxu0 %v280
        %343 = vmatprep.subr.mxu0 0.0
        %344 = vmatpush1.msra.mxu0 %v281
        %345 = vmatprep.subr.mxu0 0.0
        %346 = vmatpush1.msra.mxu0 %v282
        %347 = vmatprep.subr.mxu0 0.0
        %348 = vmatpush1.msra.mxu0 %v283
        %349 = vmatprep.subr.mxu0 0.0
        %350 = vmatpush1.msra.mxu0 0.0
        %351 = vmatprep.subr.mxu0 0.0
        %352 = vmatpush1.msra.mxu0 0.0
        %353 = vmatprep.subr.mxu0 0.0
        %354 = vmatpush1.msra.mxu0 0.0
        %355 = vmatprep.subr.mxu0 0.0
        %356 = vmatpush1.msra.mxu0 0.0
        %357 = vmatprep.subr.mxu0 0.0
        %358 = vmatpush1.msra.mxu0 0.0
        %359 = vmatprep.subr.mxu0 0.0
        %360 = vmatpush1.msra.mxu0 0.0
        %361 = vmatprep.subr.mxu0 0.0
        %362 = vmatpush1.msra.mxu0 0.0
        %363 = vmatprep.subr.mxu0 0.0
        %364 = vmatpush1.msra.mxu0 0.0
        %365 = vmatprep.subr.mxu0 0.0
        %366 = vmatpush1.msra.mxu0 0.0
        %367 = vmatprep.subr.mxu0 0.0
        %368 = vmatpush1.msra.mxu0 0.0
        %369 = vmatprep.subr.mxu0 0.0
        %370 = vmatpush1.msra.mxu0 0.0
        %371 = vmatprep.subr.mxu0 0.0
        %372 = vmatpush1.msra.mxu0 0.0
        %373 = vmatprep.subr.mxu0 0.0
        %374 = vmatpush1.msra.mxu0 0.0
        %375 = vmatprep.subr.mxu0 0.0
        %376 = vmatpush1.msra.mxu0 0.0
        %377 = vmatprep.subr.mxu0 0.0
        %378 = vmatpush1.msra.mxu0 0.0
        %379 = vmatprep.subr.mxu0 0.0
        %380 = vmatpush1.msra.mxu0 0.0
        %381 = vmatprep.subr.mxu0 0.0
        %382 = vmatpush1.msra.mxu0 0.0
        %383 = vmatprep.subr.mxu0 0.0
        %384 = vmatpush1.msra.mxu0 0.0
        %385 = vmatprep.subr.mxu0 0.0
        %386 = vmatpush1.msra.mxu0 0.0
        %387 = vmatprep.subr.mxu0 0.0
        %388 = vmatpush1.msra.mxu0 0.0
        %389 = vmatprep.subr.mxu0 0.0
        %390 = vmatpush1.msra.mxu0 0.0
        %391 = vmatprep.subr.mxu0 0.0
        %392 = vmatpush1.msra.mxu0 0.0
        %393 = vmatprep.subr.mxu0 0.0
        %394 = vmatpush1.msra.mxu0 0.0
        %395 = vmatprep.subr.mxu0 0.0
        %396 = vmatpush1.msra.mxu0 0.0
        %397 = vmatprep.mubr.f32.mxu0 0.0
        %398 = vmatmul.mubr.f32.gmra.mrb[0].mxu0 %v286
        %v399 = vpop.f32.mrb[0].mxu0
        %v400 = vadd.f32 0.0, %v399
        %v401 = vpop.f32.mrb[0].mxu0
        %402 = vmatprep.mubr.f32.mxu0 0.0
        %403 = vmatmul.mubr.f32.gmra.mrb[0].mxu0 %v289
        %v404 = vpop.f32.mrb[0].mxu0
        %v405 = vadd.f32 0.0, %v404
        %v406 = vpop.f32.mrb[0].mxu0
        %407 = vmatprep.mubr.f32.mxu0 0.0
        %408 = vmatmul.mubr.f32.gmra.mrb[0].mxu0 %v292
        %v409 = vpop.f32.mrb[0].mxu0
        %v410 = vadd.f32 0.0, %v409
        %v411 = vpop.f32.mrb[0].mxu0
        %412 = vmatprep.mubr.f32.mxu0 0.0
        %413 = vmatmul.mubr.f32.gmra.mrb[0].mxu0 %v295
        %v414 = vpop.f32.mrb[0].mxu0
        %v415 = vadd.f32 0.0, %v414
        %v416 = vpop.f32.mrb[0].mxu0
        %417 = vmatprep.mubr.f32.mxu0 0.0
        %418 = vmatmul.mubr.f32.gmra.mrb[0].mxu0 %v298
        %v419 = vpop.f32.mrb[0].mxu0
        %v420 = vadd.f32 0.0, %v419
        %v421 = vpop.f32.mrb[0].mxu0
        %422 = vmatprep.mubr.f32.mxu0 0.0
        %423 = vmatmul.mubr.f32.gmra.mrb[0].mxu0 %v301
        %v424 = vpop.f32.mrb[0].mxu0
        %v425 = vadd.f32 0.0, %v424
        %v426 = vpop.f32.mrb[0].mxu0
        %427 = vmatprep.mubr.f32.mxu0 0.0
        %428 = vmatmul.mubr.f32.gmra.mrb[0].mxu0 %v304
        %v429 = vpop.f32.mrb[0].mxu0
        %v430 = vadd.f32 0.0, %v429
        %v431 = vpop.f32.mrb[0].mxu0
        %432 = vmatprep.mubr.f32.mxu0 0.0
        %433 = vmatmul.mubr.f32.gmra.mrb[0].mxu0 %v307
        %v434 = vpop.f32.mrb[0].mxu0
        %v435 = vadd.f32 0.0, %v434
        %v436 = vpop.f32.mrb[0].mxu0
        %437 = vmatprep.mubr.f32.mxu0 0.0
        %438 = vmatmul.mubr.f32.gmra.mrb[0].mxu0 %v310
        %v439 = vpop.f32.mrb[0].mxu0
        %v440 = vadd.f32 0.0, %v439
        %v441 = vpop.f32.mrb[0].mxu0
        %442 = vmatprep.mubr.f32.mxu0 0.0
        %443 = vmatmul.mubr.f32.gmra.mrb[0].mxu0 %v313
        %v444 = vpop.f32.mrb[0].mxu0
        %v445 = vadd.f32 0.0, %v444
        %v446 = vpop.f32.mrb[0].mxu0
        %447 = vmatprep.mubr.f32.mxu0 0.0
        %448 = vmatmul.mubr.f32.gmra.mrb[0].mxu0 %v316
        %v449 = vpop.f32.mrb[0].mxu0
        %v450 = vadd.f32 0.0, %v449
        %v451 = vpop.f32.mrb[0].mxu0
        %452 = vmatprep.mubr.f32.mxu0 0.0
        %453 = vmatmul.mubr.f32.gmra.mrb[0].mxu0 %v319
        %v454 = vpop.f32.mrb[0].mxu0
        %v455 = vadd.f32 0.0, %v454
        %v456 = vpop.f32.mrb[0].mxu0
        %457 = vmatprep.mubr.f32.mxu0 0.0
        %458 = vmatmul.mubr.f32.gmra.mrb[0].mxu0 %v322
        %v459 = vpop.f32.mrb[0].mxu0
        %v460 = vadd.f32 0.0, %v459
        %v461 = vpop.f32.mrb[0].mxu0
        %462 = vmatprep.mubr.f32.mxu0 0.0
        %463 = vmatmul.mubr.f32.gmra.mrb[0].mxu0 %v325
        %v464 = vpop.f32.mrb[0].mxu0
        %v465 = vadd.f32 0.0, %v464
        %v466 = vpop.f32.mrb[0].mxu0
        %467 = vmatprep.mubr.f32.mxu0 0.0
        %468 = vmatmul.mubr.f32.gmra.mrb[0].mxu0 %v328
        %v469 = vpop.f32.mrb[0].mxu0
        %v470 = vadd.f32 0.0, %v469
        %v471 = vpop.f32.mrb[0].mxu0
        %472 = vmatprep.mubr.f32.mxu0 0.0
        %473 = vmatmul.mubr.f32.gmra.mrb[0].mxu0 %v331
        %v474 = vpop.f32.mrb[0].mxu0
        %v475 = vadd.f32 0.0, %v474
        %v476 = vpop.f32.mrb[0].mxu0
        %477 = vdwg.mxu0
        %v478 = vld [vmem:[%s256] sm:$0xff]
        %v479 = vld [vmem:[%s256 + $0x8] sm:$0xff]
        %v480 = vld [vmem:[%s256 + $0x10] sm:$0xff]
        %v481 = vld [vmem:[%s256 + $0x18] sm:$0xff]
        %v482 = vld [vmem:[%s256 + $0x20] sm:$0xff]
        %v483 = vld [vmem:[%s256 + $0x28] sm:$0xff]
        %v484 = vld [vmem:[%s256 + $0x30] sm:$0xff]
        %v485 = vld [vmem:[%s256 + $0x38] sm:$0xff]
        %v486 = vld [vmem:[%s256 + $0x40] sm:$0xff]
        %v487 = vld [vmem:[%s256 + $0x48] sm:$0xff]
        %v488 = vld [vmem:[%s256 + $0x50] sm:$0xff]
        %v489 = vld [vmem:[%s256 + $0x58] sm:$0xff]
        %v490 = vld [vmem:[%s256 + $0x60] sm:$0xff]
        %v491 = vld [vmem:[%s256 + $0x68] sm:$0xff]
        %v492 = vld [vmem:[%s256 + $0x70] sm:$0xff]
        %v493 = vld [vmem:[%s256 + $0x78] sm:$0xff]
        %v494 = vld [vmem:[%s3] sm:$0xff]
        %v495 = vld [vmem:[%s3 + $0x8] sm:$0xff]
        %v496 = vld [vmem:[%s3 + $0x10] sm:$0xff]
        %v497 = vld [vmem:[%s3 + $0x18] sm:$0xff]
        %v498 = vld [vmem:[%s3 + $0x20] sm:$0xff]
        %v499 = vld [vmem:[%s3 + $0x28] sm:$0xff]
        %v500 = vld [vmem:[%s3 + $0x30] sm:$0xff]
        %v501 = vld [vmem:[%s3 + $0x38] sm:$0xff]
        %v503 = vsel %vm284, %v478, 0
        %v506 = vsel %vm284, %v479, 0
        %v509 = vsel %vm284, %v480, 0
        %v512 = vsel %vm284, %v481, 0
        %v515 = vsel %vm284, %v482, 0
        %v518 = vsel %vm284, %v483, 0
        %v521 = vsel %vm284, %v484, 0
        %v524 = vsel %vm284, %v485, 0
        %v527 = vsel %vm284, %v486, 0
        %v530 = vsel %vm284, %v487, 0
        %v533 = vsel %vm284, %v488, 0
        %v536 = vsel %vm284, %v489, 0
        %v539 = vsel %vm284, %v490, 0
        %v542 = vsel %vm284, %v491, 0
        %v545 = vsel %vm284, %v492, 0
        %v548 = vsel %vm284, %v493, 0
        %550 = vmatprep.subr.mxu0 0.0
        %551 = vmatpush1.msra.mxu0 %v494
        %552 = vmatprep.subr.mxu0 0.0
        %553 = vmatpush1.msra.mxu0 %v495
        %554 = vmatprep.subr.mxu0 0.0
        %555 = vmatpush1.msra.mxu0 %v496
        %556 = vmatprep.subr.mxu0 0.0
        %557 = vmatpush1.msra.mxu0 %v497
        %558 = vmatprep.subr.mxu0 0.0
        %559 = vmatpush1.msra.mxu0 %v498
        %560 = vmatprep.subr.mxu0 0.0
        %561 = vmatpush1.msra.mxu0 %v499
        %562 = vmatprep.subr.mxu0 0.0
        %563 = vmatpush1.msra.mxu0 %v500
        %564 = vmatprep.subr.mxu0 0.0
        %565 = vmatpush1.msra.mxu0 %v501
        %566 = vmatprep.subr.mxu0 0.0
        %567 = vmatpush1.msra.mxu0 0.0
        %568 = vmatprep.subr.mxu0 0.0
        %569 = vmatpush1.msra.mxu0 0.0
        %570 = vmatprep.subr.mxu0 0.0
        %571 = vmatpush1.msra.mxu0 0.0
        %572 = vmatprep.subr.mxu0 0.0
        %573 = vmatpush1.msra.mxu0 0.0
        %574 = vmatprep.subr.mxu0 0.0
        %575 = vmatpush1.msra.mxu0 0.0
        %576 = vmatprep.subr.mxu0 0.0
        %577 = vmatpush1.msra.mxu0 0.0
        %578 = vmatprep.subr.mxu0 0.0
        %579 = vmatpush1.msra.mxu0 0.0
        %580 = vmatprep.subr.mxu0 0.0
        %581 = vmatpush1.msra.mxu0 0.0
        %582 = vmatprep.subr.mxu0 0.0
        %583 = vmatpush1.msra.mxu0 0.0
        %584 = vmatprep.subr.mxu0 0.0
        %585 = vmatpush1.msra.mxu0 0.0
        %586 = vmatprep.subr.mxu0 0.0
        %587 = vmatpush1.msra.mxu0 0.0
        %588 = vmatprep.subr.mxu0 0.0
        %589 = vmatpush1.msra.mxu0 0.0
        %590 = vmatprep.subr.mxu0 0.0
        %591 = vmatpush1.msra.mxu0 0.0
        %592 = vmatprep.subr.mxu0 0.0
        %593 = vmatpush1.msra.mxu0 0.0
        %594 = vmatprep.subr.mxu0 0.0
        %595 = vmatpush1.msra.mxu0 0.0
        %596 = vmatprep.subr.mxu0 0.0
        %597 = vmatpush1.msra.mxu0 0.0
        %598 = vmatprep.subr.mxu0 0.0
        %599 = vmatpush1.msra.mxu0 0.0
        %600 = vmatprep.subr.mxu0 0.0
        %601 = vmatpush1.msra.mxu0 0.0
        %602 = vmatprep.subr.mxu0 0.0
        %603 = vmatpush1.msra.mxu0 0.0
        %604 = vmatprep.subr.mxu0 0.0
        %605 = vmatpush1.msra.mxu0 0.0
        %606 = vmatprep.subr.mxu0 0.0
        %607 = vmatpush1.msra.mxu0 0.0
        %608 = vmatprep.subr.mxu0 0.0
        %609 = vmatpush1.msra.mxu0 0.0
        %610 = vmatprep.subr.mxu0 0.0
        %611 = vmatpush1.msra.mxu0 0.0
        %612 = vmatprep.subr.mxu0 0.0
        %613 = vmatpush1.msra.mxu0 0.0
        %614 = vmatprep.mubr.f32.mxu0 0.0
        %615 = vmatmul.mubr.f32.gmra.mrb[0].mxu0 %v503
        %v616 = vpop.f32.mrb[0].mxu0
        %v617 = vadd.f32 0.0, %v616
        %v618 = vpop.f32.mrb[0].mxu0
        %619 = vmatprep.mubr.f32.mxu0 0.0
        %620 = vmatmul.mubr.f32.gmra.mrb[0].mxu0 %v506
        %v621 = vpop.f32.mrb[0].mxu0
        %v622 = vadd.f32 0.0, %v621
        %v623 = vpop.f32.mrb[0].mxu0
        %624 = vmatprep.mubr.f32.mxu0 0.0
        %625 = vmatmul.mubr.f32.gmra.mrb[0].mxu0 %v509
        %v626 = vpop.f32.mrb[0].mxu0
        %v627 = vadd.f32 0.0, %v626
        %v628 = vpop.f32.mrb[0].mxu0
        %629 = vmatprep.mubr.f32.mxu0 0.0
        %630 = vmatmul.mubr.f32.gmra.mrb[0].mxu0 %v512
        %v631 = vpop.f32.mrb[0].mxu0
        %v632 = vadd.f32 0.0, %v631
        %v633 = vpop.f32.mrb[0].mxu0
        %634 = vmatprep.mubr.f32.mxu0 0.0
        %635 = vmatmul.mubr.f32.gmra.mrb[0].mxu0 %v515
        %v636 = vpop.f32.mrb[0].mxu0
        %v637 = vadd.f32 0.0, %v636
        %v638 = vpop.f32.mrb[0].mxu0
        %639 = vmatprep.mubr.f32.mxu0 0.0
        %640 = vmatmul.mubr.f32.gmra.mrb[0].mxu0 %v518
        %v641 = vpop.f32.mrb[0].mxu0
        %v642 = vadd.f32 0.0, %v641
        %v643 = vpop.f32.mrb[0].mxu0
        %644 = vmatprep.mubr.f32.mxu0 0.0
        %645 = vmatmul.mubr.f32.gmra.mrb[0].mxu0 %v521
        %v646 = vpop.f32.mrb[0].mxu0
        %v647 = vadd.f32 0.0, %v646
        %v648 = vpop.f32.mrb[0].mxu0
        %649 = vmatprep.mubr.f32.mxu0 0.0
        %650 = vmatmul.mubr.f32.gmra.mrb[0].mxu0 %v524
        %v651 = vpop.f32.mrb[0].mxu0
        %v652 = vadd.f32 0.0, %v651
        %v653 = vpop.f32.mrb[0].mxu0
        %654 = vmatprep.mubr.f32.mxu0 0.0
        %655 = vmatmul.mubr.f32.gmra.mrb[0].mxu0 %v527
        %v656 = vpop.f32.mrb[0].mxu0
        %v657 = vadd.f32 0.0, %v656
        %v658 = vpop.f32.mrb[0].mxu0
        %659 = vmatprep.mubr.f32.mxu0 0.0
        %660 = vmatmul.mubr.f32.gmra.mrb[0].mxu0 %v530
        %v661 = vpop.f32.mrb[0].mxu0
        %v662 = vadd.f32 0.0, %v661
        %v663 = vpop.f32.mrb[0].mxu0
        %664 = vmatprep.mubr.f32.mxu0 0.0
        %665 = vmatmul.mubr.f32.gmra.mrb[0].mxu0 %v533
        %v666 = vpop.f32.mrb[0].mxu0
        %v667 = vadd.f32 0.0, %v666
        %v668 = vpop.f32.mrb[0].mxu0
        %669 = vmatprep.mubr.f32.mxu0 0.0
        %670 = vmatmul.mubr.f32.gmra.mrb[0].mxu0 %v536
        %v671 = vpop.f32.mrb[0].mxu0
        %v672 = vadd.f32 0.0, %v671
        %v673 = vpop.f32.mrb[0].mxu0
        %674 = vmatprep.mubr.f32.mxu0 0.0
        %675 = vmatmul.mubr.f32.gmra.mrb[0].mxu0 %v539
        %v676 = vpop.f32.mrb[0].mxu0
        %v677 = vadd.f32 0.0, %v676
        %v678 = vpop.f32.mrb[0].mxu0
        %679 = vmatprep.mubr.f32.mxu0 0.0
        %680 = vmatmul.mubr.f32.gmra.mrb[0].mxu0 %v542
        %v681 = vpop.f32.mrb[0].mxu0
        %v682 = vadd.f32 0.0, %v681
        %v683 = vpop.f32.mrb[0].mxu0
        %684 = vmatprep.mubr.f32.mxu0 0.0
        %685 = vmatmul.mubr.f32.gmra.mrb[0].mxu0 %v545
        %v686 = vpop.f32.mrb[0].mxu0
        %v687 = vadd.f32 0.0, %v686
        %v688 = vpop.f32.mrb[0].mxu0
        %689 = vmatprep.mubr.f32.mxu0 0.0
        %690 = vmatmul.mubr.f32.gmra.mrb[0].mxu0 %v548
        %v691 = vpop.f32.mrb[0].mxu0
        %v692 = vadd.f32 0.0, %v691
        %v693 = vpop.f32.mrb[0].mxu0
        %694 = vdwg.mxu0
        %vm695 = vcmp.gt.f32.partialorder %v400, 0.0
        %vm696 = vcmp.gt.f32.partialorder %v405, 0.0
        %vm697 = vcmp.gt.f32.partialorder %v410, 0.0
        %vm698 = vcmp.gt.f32.partialorder %v415, 0.0
        %vm699 = vcmp.gt.f32.partialorder %v420, 0.0
        %vm700 = vcmp.gt.f32.partialorder %v425, 0.0
        %vm701 = vcmp.gt.f32.partialorder %v430, 0.0
        %vm702 = vcmp.gt.f32.partialorder %v435, 0.0
        %vm703 = vcmp.gt.f32.partialorder %v440, 0.0
        %vm704 = vcmp.gt.f32.partialorder %v445, 0.0
        %vm705 = vcmp.gt.f32.partialorder %v450, 0.0
        %vm706 = vcmp.gt.f32.partialorder %v455, 0.0
        %vm707 = vcmp.gt.f32.partialorder %v460, 0.0
        %vm708 = vcmp.gt.f32.partialorder %v465, 0.0
        %vm709 = vcmp.gt.f32.partialorder %v470, 0.0
        %vm710 = vcmp.gt.f32.partialorder %v475, 0.0
        %v711 = vmin.f32 %v400, 0.0
        %v712 = vmin.f32 %v405, 0.0
        %v713 = vmin.f32 %v410, 0.0
        %v714 = vmin.f32 %v415, 0.0
        %v715 = vmin.f32 %v420, 0.0
        %v716 = vmin.f32 %v425, 0.0
        %v717 = vmin.f32 %v430, 0.0
        %v718 = vmin.f32 %v435, 0.0
        %v719 = vmin.f32 %v440, 0.0
        %v720 = vmin.f32 %v445, 0.0
        %v721 = vmin.f32 %v450, 0.0
        %v722 = vmin.f32 %v455, 0.0
        %v723 = vmin.f32 %v460, 0.0
        %v724 = vmin.f32 %v465, 0.0
        %v725 = vmin.f32 %v470, 0.0
        %v726 = vmin.f32 %v475, 0.0
        %v727 = vmul.f32 %v711, 1.442695
        %v728 = vpow.pop %v727
        %v729 = vmul.f32 %v712, 1.442695
        %v730 = vpow.pop %v729
        %v731 = vmul.f32 %v713, 1.442695
        %v732 = vpow.pop %v731
        %v733 = vmul.f32 %v714, 1.442695
        %v734 = vpow.pop %v733
        %v735 = vmul.f32 %v715, 1.442695
        %v736 = vpow.pop %v735
        %v737 = vmul.f32 %v716, 1.442695
        %v738 = vpow.pop %v737
        %v739 = vmul.f32 %v717, 1.442695
        %v740 = vpow.pop %v739
        %v741 = vmul.f32 %v718, 1.442695
        %v742 = vpow.pop %v741
        %v743 = vmul.f32 %v719, 1.442695
        %v744 = vpow.pop %v743
        %v745 = vmul.f32 %v720, 1.442695
        %v746 = vpow.pop %v745
        %v747 = vmul.f32 %v721, 1.442695
        %v748 = vpow.pop %v747
        %v749 = vmul.f32 %v722, 1.442695
        %v750 = vpow.pop %v749
        %v751 = vmul.f32 %v723, 1.442695
        %v752 = vpow.pop %v751
        %v753 = vmul.f32 %v724, 1.442695
        %v754 = vpow.pop %v753
        %v755 = vmul.f32 %v725, 1.442695
        %v756 = vpow.pop %v755
        %v757 = vmul.f32 %v726, 1.442695
        %v758 = vpow.pop %v757
        %v759 = vsub.f32 %v728, 1.0
        %v760 = vsub.f32 %v730, 1.0
        %v761 = vsub.f32 %v732, 1.0
        %v762 = vsub.f32 %v734, 1.0
        %v763 = vsub.f32 %v736, 1.0
        %v764 = vsub.f32 %v738, 1.0
        %v765 = vsub.f32 %v740, 1.0
        %v766 = vsub.f32 %v742, 1.0
        %v767 = vsub.f32 %v744, 1.0
        %v768 = vsub.f32 %v746, 1.0
        %v769 = vsub.f32 %v748, 1.0
        %v770 = vsub.f32 %v750, 1.0
        %v771 = vsub.f32 %v752, 1.0
        %v772 = vsub.f32 %v754, 1.0
        %v773 = vsub.f32 %v756, 1.0
        %v774 = vsub.f32 %v758, 1.0
        %v775 = vsel %vm695, %v400, %v759
        %v776 = vsel %vm696, %v405, %v760
        %v777 = vsel %vm697, %v410, %v761
        %v778 = vsel %vm698, %v415, %v762
        %v779 = vsel %vm699, %v420, %v763
        %v780 = vsel %vm700, %v425, %v764
        %v781 = vsel %vm701, %v430, %v765
        %v782 = vsel %vm702, %v435, %v766
        %v783 = vsel %vm703, %v440, %v767
        %v784 = vsel %vm704, %v445, %v768
        %v785 = vsel %vm705, %v450, %v769
        %v786 = vsel %vm706, %v455, %v770
        %v787 = vsel %vm707, %v460, %v771
        %v788 = vsel %vm708, %v465, %v772
        %v789 = vsel %vm709, %v470, %v773
        %v790 = vsel %vm710, %v475, %v774
        %v791 = vmax.f32 %v617, 0.0
        %v792 = vmax.f32 %v622, 0.0
        %v793 = vmax.f32 %v627, 0.0
        %v794 = vmax.f32 %v632, 0.0
        %v795 = vmax.f32 %v637, 0.0
        %v796 = vmax.f32 %v642, 0.0
        %v797 = vmax.f32 %v647, 0.0
        %v798 = vmax.f32 %v652, 0.0
        %v799 = vmax.f32 %v657, 0.0
        %v800 = vmax.f32 %v662, 0.0
        %v801 = vmax.f32 %v667, 0.0
        %v802 = vmax.f32 %v672, 0.0
        %v803 = vmax.f32 %v677, 0.0
        %v804 = vmax.f32 %v682, 0.0
        %v805 = vmax.f32 %v687, 0.0
        %v806 = vmax.f32 %v692, 0.0
        %v807 = vmul.f32 %v791, -1.0
        %v808 = vmul.f32 %v792, -1.0
        %v809 = vmul.f32 %v793, -1.0
        %v810 = vmul.f32 %v794, -1.0
        %v811 = vmul.f32 %v795, -1.0
        %v812 = vmul.f32 %v796, -1.0
        %v813 = vmul.f32 %v797, -1.0
        %v814 = vmul.f32 %v798, -1.0
        %v815 = vmul.f32 %v799, -1.0
        %v816 = vmul.f32 %v800, -1.0
        %v817 = vmul.f32 %v801, -1.0
        %v818 = vmul.f32 %v802, -1.0
        %v819 = vmul.f32 %v803, -1.0
        %v820 = vmul.f32 %v804, -1.0
        %v821 = vmul.f32 %v805, -1.0
        %v822 = vmul.f32 %v806, -1.0
        %v823 = vmul.f32 %v807, 1.442695
        %v824 = vpow.pop %v823
        %v825 = vmul.f32 %v808, 1.442695
        %v826 = vpow.pop %v825
        %v827 = vmul.f32 %v809, 1.442695
        %v828 = vpow.pop %v827
        %v829 = vmul.f32 %v810, 1.442695
        %v830 = vpow.pop %v829
        %v831 = vmul.f32 %v811, 1.442695
        %v832 = vpow.pop %v831
        %v833 = vmul.f32 %v812, 1.442695
        %v834 = vpow.pop %v833
        %v835 = vmul.f32 %v813, 1.442695
        %v836 = vpow.pop %v835
        %v837 = vmul.f32 %v814, 1.442695
        %v838 = vpow.pop %v837
        %v839 = vmul.f32 %v815, 1.442695
        %v840 = vpow.pop %v839
        %v841 = vmul.f32 %v816, 1.442695
        %v842 = vpow.pop %v841
        %v843 = vmul.f32 %v817, 1.442695
        %v844 = vpow.pop %v843
        %v845 = vmul.f32 %v818, 1.442695
        %v846 = vpow.pop %v845
        %v847 = vmul.f32 %v819, 1.442695
        %v848 = vpow.pop %v847
        %v849 = vmul.f32 %v820, 1.442695
        %v850 = vpow.pop %v849
        %v851 = vmul.f32 %v821, 1.442695
        %v852 = vpow.pop %v851
        %v853 = vmul.f32 %v822, 1.442695
        %v854 = vpow.pop %v853
        %v855 = vmul.f32 %v775, %v824
        %v856 = vmul.f32 %v776, %v826
        %v857 = vmul.f32 %v777, %v828
        %v858 = vmul.f32 %v778, %v830
        %v859 = vmul.f32 %v779, %v832
        %v860 = vmul.f32 %v780, %v834
        %v861 = vmul.f32 %v781, %v836
        %v862 = vmul.f32 %v782, %v838
        %v863 = vmul.f32 %v783, %v840
        %v864 = vmul.f32 %v784, %v842
        %v865 = vmul.f32 %v785, %v844
        %v866 = vmul.f32 %v786, %v846
        %v867 = vmul.f32 %v787, %v848
        %v868 = vmul.f32 %v788, %v850
        %v869 = vmul.f32 %v789, %v852
        %v870 = vmul.f32 %v790, %v854
        %v871 = vsel %vm284, %v855, 0.0
        %v872 = vsel %vm284, %v856, 0.0
        %v873 = vsel %vm284, %v857, 0.0
        %v874 = vsel %vm284, %v858, 0.0
        %v875 = vsel %vm284, %v859, 0.0
        %v876 = vsel %vm284, %v860, 0.0
        %v877 = vsel %vm284, %v861, 0.0
        %v878 = vsel %vm284, %v862, 0.0
        %v879 = vsel %vm284, %v863, 0.0
        %v880 = vsel %vm284, %v864, 0.0
        %v881 = vsel %vm284, %v865, 0.0
        %v882 = vsel %vm284, %v866, 0.0
        %v883 = vsel %vm284, %v867, 0.0
        %v884 = vsel %vm284, %v868, 0.0
        %v885 = vsel %vm284, %v869, 0.0
        %v886 = vsel %vm284, %v870, 0.0
        %v887 = vpack.c.bf16 %v872, %v871
        %v888 = vpack.c.bf16 %v874, %v873
        %v889 = vpack.c.bf16 %v876, %v875
        %v890 = vpack.c.bf16 %v878, %v877
        %v891 = vpack.c.bf16 %v880, %v879
        %v892 = vpack.c.bf16 %v882, %v881
        %v893 = vpack.c.bf16 %v884, %v883
        %v894 = vpack.c.bf16 %v886, %v885
        %v903 = vunpack.c.l.b16 %v887
        %v904 = vunpack.c.h.b16 %v887
        %v905 = vunpack.c.l.b16 %v888
        %v906 = vunpack.c.h.b16 %v888
        %v907 = vunpack.c.l.b16 %v889
        %v908 = vunpack.c.h.b16 %v889
        %v909 = vunpack.c.l.b16 %v890
        %v910 = vunpack.c.h.b16 %v890
        %v911 = vunpack.c.l.b16 %v891
        %v912 = vunpack.c.h.b16 %v891
        %v913 = vunpack.c.l.b16 %v892
        %v914 = vunpack.c.h.b16 %v892
        %v915 = vunpack.c.l.b16 %v893
        %v916 = vunpack.c.h.b16 %v893
        %v917 = vunpack.c.l.b16 %v894
        %v918 = vunpack.c.h.b16 %v894
        %v919 = vpack.c.b16 %v903, %v903
        %v920 = vpack.c.b16 %v904, %v904
        %v921 = vpack.c.b16 %v905, %v905
        %v922 = vpack.c.b16 %v906, %v906
        %v923 = vpack.c.b16 %v907, %v907
        %v924 = vpack.c.b16 %v908, %v908
        %v925 = vpack.c.b16 %v909, %v909
        %v926 = vpack.c.b16 %v910, %v910
        %v927 = vpack.c.b16 %v911, %v911
        %v928 = vpack.c.b16 %v912, %v912
        %v929 = vpack.c.b16 %v913, %v913
        %v930 = vpack.c.b16 %v914, %v914
        %v931 = vpack.c.b16 %v915, %v915
        %v932 = vpack.c.b16 %v916, %v916
        %v933 = vpack.c.b16 %v917, %v917
        %v934 = vpack.c.b16 %v918, %v918
        %951 = vst [vmem:[%s238] sm:$0xf] %v919
        %952 = vst [vmem:[%s238 + $0x4] sm:$0xf] %v920
        %953 = vst [vmem:[%s238 + $0x8] sm:$0xf] %v921
        %954 = vst [vmem:[%s238 + $0xc] sm:$0xf] %v922
        %955 = vst [vmem:[%s238 + $0x10] sm:$0xf] %v923
        %956 = vst [vmem:[%s238 + $0x14] sm:$0xf] %v924
        %957 = vst [vmem:[%s238 + $0x18] sm:$0xf] %v925
        %958 = vst [vmem:[%s238 + $0x1c] sm:$0xf] %v926
        %959 = vst [vmem:[%s238 + $0x20] sm:$0xf] %v927
        %960 = vst [vmem:[%s238 + $0x24] sm:$0xf] %v928
        %961 = vst [vmem:[%s238 + $0x28] sm:$0xf] %v929
        %962 = vst [vmem:[%s238 + $0x2c] sm:$0xf] %v930
        %963 = vst [vmem:[%s238 + $0x30] sm:$0xf] %v931
        %964 = vst [vmem:[%s238 + $0x34] sm:$0xf] %v932
        %965 = vst [vmem:[%s238 + $0x38] sm:$0xf] %v933
        %966 = vst [vmem:[%s238 + $0x3c] sm:$0xf] %v934
        %v967 = vmul.f32 %v791, %v824
        %v968 = vmul.f32 %v792, %v826
        %v969 = vmul.f32 %v793, %v828
        %v970 = vmul.f32 %v794, %v830
        %v971 = vmul.f32 %v795, %v832
        %v972 = vmul.f32 %v796, %v834
        %v973 = vmul.f32 %v797, %v836
        %v974 = vmul.f32 %v798, %v838
        %v975 = vmul.f32 %v799, %v840
        %v976 = vmul.f32 %v800, %v842
        %v977 = vmul.f32 %v801, %v844
        %v978 = vmul.f32 %v802, %v846
        %v979 = vmul.f32 %v803, %v848
        %v980 = vmul.f32 %v804, %v850
        %v981 = vmul.f32 %v805, %v852
        %v982 = vmul.f32 %v806, %v854
        %v983 = vmul.f32 %v967, %v824
        %v984 = vmul.f32 %v968, %v826
        %v985 = vmul.f32 %v969, %v828
        %v986 = vmul.f32 %v970, %v830
        %v987 = vmul.f32 %v971, %v832
        %v988 = vmul.f32 %v972, %v834
        %v989 = vmul.f32 %v973, %v836
        %v990 = vmul.f32 %v974, %v838
        %v991 = vmul.f32 %v975, %v840
        %v992 = vmul.f32 %v976, %v842
        %v993 = vmul.f32 %v977, %v844
        %v994 = vmul.f32 %v978, %v846
        %v995 = vmul.f32 %v979, %v848
        %v996 = vmul.f32 %v980, %v850
        %v997 = vmul.f32 %v981, %v852
        %v998 = vmul.f32 %v982, %v854
        %1015 = vrot.lane.b32.xlu0 %v983, 64
        %v1016 = vpop.permute.xlu0 %1015
        %1017 = vrot.lane.b32.xlu0 %v984, 64
        %v1018 = vpop.permute.xlu0 %1017
        %1019 = vrot.lane.b32.xlu0 %v985, 64
        %v1020 = vpop.permute.xlu0 %1019
        %1021 = vrot.lane.b32.xlu0 %v986, 64
        %v1022 = vpop.permute.xlu0 %1021
        %1023 = vrot.lane.b32.xlu0 %v987, 64
        %v1024 = vpop.permute.xlu0 %1023
        %1025 = vrot.lane.b32.xlu0 %v988, 64
        %v1026 = vpop.permute.xlu0 %1025
        %1027 = vrot.lane.b32.xlu0 %v989, 64
        %v1028 = vpop.permute.xlu0 %1027
        %1029 = vrot.lane.b32.xlu0 %v990, 64
        %v1030 = vpop.permute.xlu0 %1029
        %1031 = vrot.lane.b32.xlu0 %v991, 64
        %v1032 = vpop.permute.xlu0 %1031
        %1033 = vrot.lane.b32.xlu0 %v992, 64
        %v1034 = vpop.permute.xlu0 %1033
        %1035 = vrot.lane.b32.xlu0 %v993, 64
        %v1036 = vpop.permute.xlu0 %1035
        %1037 = vrot.lane.b32.xlu0 %v994, 64
        %v1038 = vpop.permute.xlu0 %1037
        %1039 = vrot.lane.b32.xlu0 %v995, 64
        %v1040 = vpop.permute.xlu0 %1039
        %1041 = vrot.lane.b32.xlu0 %v996, 64
        %v1042 = vpop.permute.xlu0 %1041
        %1043 = vrot.lane.b32.xlu0 %v997, 64
        %v1044 = vpop.permute.xlu0 %1043
        %1045 = vrot.lane.b32.xlu0 %v998, 64
        %v1046 = vpop.permute.xlu0 %1045
        %v1063 = vsel %vm284, 0.0, %v1016
        %v1064 = vsel %vm284, 0.0, %v1018
        %v1065 = vsel %vm284, 0.0, %v1020
        %v1066 = vsel %vm284, 0.0, %v1022
        %v1067 = vsel %vm284, 0.0, %v1024
        %v1068 = vsel %vm284, 0.0, %v1026
        %v1069 = vsel %vm284, 0.0, %v1028
        %v1070 = vsel %vm284, 0.0, %v1030
        %v1071 = vsel %vm284, 0.0, %v1032
        %v1072 = vsel %vm284, 0.0, %v1034
        %v1073 = vsel %vm284, 0.0, %v1036
        %v1074 = vsel %vm284, 0.0, %v1038
        %v1075 = vsel %vm284, 0.0, %v1040
        %v1076 = vsel %vm284, 0.0, %v1042
        %v1077 = vsel %vm284, 0.0, %v1044
        %v1078 = vsel %vm284, 0.0, %v1046
        %v1079 = vpack.c.bf16 %v1064, %v1063
        %v1080 = vpack.c.bf16 %v1066, %v1065
        %v1081 = vpack.c.bf16 %v1068, %v1067
        %v1082 = vpack.c.bf16 %v1070, %v1069
        %v1083 = vpack.c.bf16 %v1072, %v1071
        %v1084 = vpack.c.bf16 %v1074, %v1073
        %v1085 = vpack.c.bf16 %v1076, %v1075
        %v1086 = vpack.c.bf16 %v1078, %v1077
        %v1095 = vunpack.c.l.b16 %v1079
        %v1096 = vunpack.c.h.b16 %v1079
        %v1097 = vunpack.c.l.b16 %v1080
        %v1098 = vunpack.c.h.b16 %v1080
        %v1099 = vunpack.c.l.b16 %v1081
        %v1100 = vunpack.c.h.b16 %v1081
        %v1101 = vunpack.c.l.b16 %v1082
        %v1102 = vunpack.c.h.b16 %v1082
        %v1103 = vunpack.c.l.b16 %v1083
        %v1104 = vunpack.c.h.b16 %v1083
        %v1105 = vunpack.c.l.b16 %v1084
        %v1106 = vunpack.c.h.b16 %v1084
        %v1107 = vunpack.c.l.b16 %v1085
        %v1108 = vunpack.c.h.b16 %v1085
        %v1109 = vunpack.c.l.b16 %v1086
        %v1110 = vunpack.c.h.b16 %v1086
        %v1111 = vpack.c.b16 %v1095, %v1095
        %v1112 = vpack.c.b16 %v1096, %v1096
        %v1113 = vpack.c.b16 %v1097, %v1097
        %v1114 = vpack.c.b16 %v1098, %v1098
        %v1115 = vpack.c.b16 %v1099, %v1099
        %v1116 = vpack.c.b16 %v1100, %v1100
        %v1117 = vpack.c.b16 %v1101, %v1101
        %v1118 = vpack.c.b16 %v1102, %v1102
        %v1119 = vpack.c.b16 %v1103, %v1103
        %v1120 = vpack.c.b16 %v1104, %v1104
        %v1121 = vpack.c.b16 %v1105, %v1105
        %v1122 = vpack.c.b16 %v1106, %v1106
        %v1123 = vpack.c.b16 %v1107, %v1107
        %v1124 = vpack.c.b16 %v1108, %v1108
        %v1125 = vpack.c.b16 %v1109, %v1109
        %v1126 = vpack.c.b16 %v1110, %v1110
        %1143 = vst [vmem:[%s245] sm:$0xf] %v1111
        %1144 = vst [vmem:[%s245 + $0x4] sm:$0xf] %v1112
        %1145 = vst [vmem:[%s245 + $0x8] sm:$0xf] %v1113
        %1146 = vst [vmem:[%s245 + $0xc] sm:$0xf] %v1114
        %1147 = vst [vmem:[%s245 + $0x10] sm:$0xf] %v1115
        %1148 = vst [vmem:[%s245 + $0x14] sm:$0xf] %v1116
        %1149 = vst [vmem:[%s245 + $0x18] sm:$0xf] %v1117
        %1150 = vst [vmem:[%s245 + $0x1c] sm:$0xf] %v1118
        %1151 = vst [vmem:[%s245 + $0x20] sm:$0xf] %v1119
        %1152 = vst [vmem:[%s245 + $0x24] sm:$0xf] %v1120
        %1153 = vst [vmem:[%s245 + $0x28] sm:$0xf] %v1121
        %1154 = vst [vmem:[%s245 + $0x2c] sm:$0xf] %v1122
        %1155 = vst [vmem:[%s245 + $0x30] sm:$0xf] %v1123
        %1156 = vst [vmem:[%s245 + $0x34] sm:$0xf] %v1124
        %1157 = vst [vmem:[%s245 + $0x38] sm:$0xf] %v1125
        %1158 = vst [vmem:[%s245 + $0x3c] sm:$0xf] %v1126
        %s1159 = sand.u32 %s125, 1
        %s1160 = scalar_lea.sflag [#allocation3], %s1159
        %s1161 = sand.u32 %s125, 1
        %s1162 = smul.addr %s1161, 64
        %s1163 = scalar_lea.vmem [#allocation2], %s1162
        %s1164 = sand.u32 %s151, 1
        %s1165 = scalar_lea.sflag [#allocation5], %s1164
        %s1166 = sand.u32 %s151, 1
        %s1167 = smul.addr %s1166, 64
        %s1168 = scalar_lea.vmem [#allocation4], %s1167
        // Predicated region
        $region37: #{tpu_custom_call.1} parent=35 // pred_check
          %p1169 = pneg %p135
        $region38: #{tpu_custom_call.1} parent=35 // pred_check_branch
          %1171 = sbr.rel (%p1169) target = $region40
        $region39: #{tpu_custom_call.1} parent=35 // pred_region
          %s1172 = smul.u32 16, %s23
          %s1174 = ssub.s32 1024, 1024
          %1175 = vsyncadd %s1160, %s1174
          %s1176 = smul.addr %s1172, 64
          %s1177 = scalar_lea.hbm %s4, %s1176
          %s1178 = sshll.u32 %s1163, 4
          %s1179 = int_to_ptr.vmem [resolvable:$true] %s1178
          %1184 = dma.vmem_to_hbm [thread:$0]  %s1179, 1024, %s1177, %s1160, 64, 64, 4
        $region40: #{tpu_custom_call.1} parent=35 // pred_fallthru
          _
        // Predicated region
        $region41: #{tpu_custom_call.1} parent=35 // pred_check
          %p1185 = pneg %p161
        $region42: #{tpu_custom_call.1} parent=35 // pred_check_branch
          %1187 = sbr.rel (%p1185) target = $region44
        $region43: #{tpu_custom_call.1} parent=35 // pred_region
          %s1188 = smul.u32 16, %s23
          %s1190 = ssub.s32 1024, 1024
          %1191 = vsyncadd %s1165, %s1190
          %s1192 = smul.addr %s1188, 64
          %s1193 = scalar_lea.hbm %s5, %s1192
          %s1194 = sshll.u32 %s1168, 4
          %s1195 = int_to_ptr.vmem [resolvable:$true] %s1194
          %1200 = dma.vmem_to_hbm [thread:$0]  %s1195, 1024, %s1193, %s1165, 64, 64, 4
        $region44: #{tpu_custom_call.1} parent=35 // pred_fallthru
          _
      $region36: #{tpu_custom_call.1} parent=5 // pred_fallthru
        _
      %p1201 = scmp.le.s32.totalorder 2, %s18
      // Predicated region
      $region45: #{tpu_custom_call.1} parent=5 // pred_check
        %p1202 = pneg %p1201
      $region46: #{tpu_custom_call.1} parent=5 // pred_check_branch
        %1204 = sbr.rel (%p1202) target = $region48
      $region47: #{tpu_custom_call.1} parent=5 // pred_region
        %s1205 = ssub.s32 %s18, 2
        // Predicated region
        $region49: #{tpu_custom_call.1} parent=47 // pred_check
          %p1206 = pneg %p141
        $region50: #{tpu_custom_call.1} parent=47 // pred_check_branch
          %1208 = sbr.rel (%p1206) target = $region52
        $region51: #{tpu_custom_call.1} parent=47 // pred_region
          %s1209 = sand.u32 %s126, 1
          %s1210 = scalar_lea.sflag [#allocation3], %s1209
          %s1211 = sand.u32 %s126, 1
          %s1212 = smul.addr %s1211, 64
          %s1213 = scalar_lea.vmem [#allocation2], %s1212
          %1214 = dma.done %s1210, 1024
        $region52: #{tpu_custom_call.1} parent=47 // pred_fallthru
          _
        // Predicated region
        $region53: #{tpu_custom_call.1} parent=47 // pred_check
          %p1215 = pneg %p167
        $region54: #{tpu_custom_call.1} parent=47 // pred_check_branch
          %1217 = sbr.rel (%p1215) target = $region56
        $region55: #{tpu_custom_call.1} parent=47 // pred_region
          %s1218 = sand.u32 %s152, 1
          %s1219 = scalar_lea.sflag [#allocation5], %s1218
          %s1220 = sand.u32 %s152, 1
          %s1221 = smul.addr %s1220, 64
          %s1222 = scalar_lea.vmem [#allocation4], %s1221
          %1223 = dma.done %s1219, 1024
        $region56: #{tpu_custom_call.1} parent=47 // pred_fallthru
          _
      $region48: #{tpu_custom_call.1} parent=5 // pred_fallthru
        _
    $region6: #{tpu_custom_call.1} parent=1 // loop_footer
      %s22 = sadd.s32 1, %s18
    $region7: #{tpu_custom_call.1} parent=1 // loop_footer_branch
      %17 = sbr.rel target = $region3
    $region8: #{tpu_custom_call.1} parent=1 // loop_exit
      _
    %1224 = vsyncpa [#allocation3], 1
    %s1225 = scalar_lea.sflag [#allocation3], 1
    %1226 = vsyncpa %s1225, 1
    %1227 = vsyncpa [#allocation5], 1
    %s1228 = scalar_lea.sflag [#allocation5], 1
    %1229 = vsyncpa %s1228, 1

</llo_original>
